<compile_context>
chip_gen: v5e
topology: v5e:2x2
jax: 0.10.0
libtpu: 0.0.40
codegen_flags: <defaults>
</compile_context>

<pallas_src>
import jax
import jax.numpy as jnp
from jax.experimental import pallas as pl
from jax.experimental.pallas import tpu as pltpu


def _round_up(a, b):
    return ((a + b - 1) // b) * b


def _block_diag(w, p):
    """(C, C) -> (p*C, p*C) block-diagonal matrix with `w` repeated p times."""
    if p == 1:
        return w
    c = w.shape[0]
    eye = jnp.eye(p, dtype=w.dtype)
    return (eye[:, None, :, None] * w[None, :, None, :]).reshape(p * c, p * c)


def _resblock_kernel(x_ref, w1_ref, w2_ref, o_ref):
    # x_ref : (TM, W)  tile of (lane-packed) activation rows
    # w1_ref: (W, W)   first  linear weight (transposed, block-diag packed)
    # w2_ref: (W, W)   second linear weight (transposed, block-diag packed)
    x = x_ref[...]
    h = jnp.dot(x, w1_ref[...], preferred_element_type=jnp.float32)
    h = jnp.maximum(h, 0.0)                                  # ReLU
    # Intentional downcast: feed the MXU in the streaming dtype (bf16 when
    # bf16 streaming is enabled), accumulate in f32.
    t = jnp.dot(h.astype(w2_ref.dtype), w2_ref[...],
                preferred_element_type=jnp.float32)
    t = jnp.maximum(t, 0.0)                                  # ReLU
    o_ref[...] = (x.astype(jnp.float32) + t).astype(o_ref.dtype)


def residual_block_forward(x, w1, w2, *, tile_m=512, pack_width=128,
                           compute_dtype=None):
    """x: (..., C); w1, w2: (C, C) PyTorch-layout Linear weights (y = x @ W.T).

    tile_m:        packed rows per grid step (rounded to a multiple of 16).
    pack_width:    target lane width when C < 128 (128; use 256 on v6e/v7x to
                   fill the 256x256 MXU).
    compute_dtype: e.g. jnp.bfloat16 to halve HBM traffic (f32 accumulation).
    """
    orig_shape = x.shape
    orig_dtype = x.dtype
    C = orig_shape[-1]

    if compute_dtype is not None:
        x = x.astype(compute_dtype)
        w1 = w1.astype(compute_dtype)
        w2 = w2.astype(compute_dtype)

    x2d = x.reshape(-1, C)
    M0 = x2d.shape[0]

    # nn.Linear: y = x @ W.T  -> pre-transpose once in plain JAX (glue).
    w1t, w2t = w1.T, w2.T

    # --- lane packing / channel padding ------------------------------------
    if C % 128 == 0:
        P, Cp = 1, C                                  # already lane-dense
    elif 128 % C == 0:
        P, Cp = max(pack_width // C, 1), C            # pack P rows per vreg row
    else:
        P, Cp = 1, _round_up(C, 128)                  # zero-pad channels
        pad_c = Cp - C
        x2d = jnp.pad(x2d, ((0, 0), (0, pad_c)))
        w1t = jnp.pad(w1t, ((0, pad_c), (0, pad_c)))
        w2t = jnp.pad(w2t, ((0, pad_c), (0, pad_c)))
    W = P * Cp

    w1_big = _block_diag(w1t, P)
    w2_big = _block_diag(w2t, P)

    # --- row padding + packing ----------------------------------------------
    row_pad = (-M0) % P
    if row_pad:
        x2d = jnp.pad(x2d, ((0, row_pad), (0, 0)))
    M1 = M0 + row_pad
    Mp = M1 // P
    x_packed = x2d.reshape(Mp, W)                     # row-major view, no data change

    tile = _round_up(max(int(tile_m), 16), 16)        # mult of 16 (bf16-safe)
    tile = min(tile, _round_up(Mp, 16))               # don't over-pad tiny inputs
    Mp_pad = _round_up(Mp, tile)
    if Mp_pad != Mp:
        x_packed = jnp.pad(x_packed, ((0, Mp_pad - Mp), (0, 0)))

    grid = (Mp_pad // tile,)

    out = pl.pallas_call(
        _resblock_kernel,
        out_shape=jax.ShapeDtypeStruct((Mp_pad, W), x_packed.dtype),
        grid_spec=pltpu.PrefetchScalarGridSpec(
            num_scalar_prefetch=0,
            grid=grid,
            in_specs=[
                pl.BlockSpec((tile, W), lambda i: (i, 0)),   # packed activations
                # Constant index_map -> weights fetched once, stay VMEM-resident.
                # (pipeline_mode=pl.Buffered(1) would halve their VMEM footprint
                #  for large C; negligible at W=128/256 so left at default.)
                pl.BlockSpec((W, W), lambda i: (0, 0)),      # W1^T (block-diag)
                pl.BlockSpec((W, W), lambda i: (0, 0)),      # W2^T (block-diag)
            ],
            out_specs=pl.BlockSpec((tile, W), lambda i: (i, 0)),
        ),
        compiler_params=pltpu.CompilerParams(
            dimension_semantics=("parallel",)),              # megacore sharding
    )(x_packed, w1_big, w2_big)

    # --- unpack --------------------------------------------------------------
    out = out[:Mp].reshape(M1, Cp)[:M0, :C]
    return out.astype(orig_dtype).reshape(orig_shape)


def _reference(x, w1, w2):
    # Pure-JAX reference matching PyTorch semantics.
    t = jnp.maximum(x @ w1.T, 0.0)
    t = jnp.maximum(t @ w2.T, 0.0)
    return x + t


if __name__ == "__main__":
    key = jax.random.PRNGKey(0)
    kx, k1, k2, kx2 = jax.random.split(key, 4)

    # Small shapes consistent with the module: n_chans=32, batch=2, seq=8.
    n_chans = 32
    batch, seq = 2, 8

    x = jax.random.normal(kx, (batch, seq, n_chans), dtype=jnp.float32)

    # Deterministic synthetic Linear weights ((out, in) like PyTorch),
    # scaled roughly like Kaiming-uniform bound 1/sqrt(fan_in).
    bound = 1.0 / (n_chans ** 0.5)
    w1 = jax.random.uniform(k1, (n_chans, n_chans), jnp.float32, -bound, bound)
    w2 = jax.random.uniform(k2, (n_chans, n_chans), jnp.float32, -bound, bound)

    y_ref = _reference(x, w1, w2)

    # 1) f32, lane-packed (C=32 -> 128 lanes), single big tile.
    y = jax.block_until_ready(residual_block_forward(x, w1, w2))
    assert y.shape == x.shape
    assert jnp.allclose(y, y_ref, atol=1e-5, rtol=1e-5), "f32 mismatch vs reference"

    # 2) bf16 activation streaming (f32 accumulation); loose tolerance vs f32.
    y_bf = jax.block_until_ready(
        residual_block_forward(x, w1, w2, compute_dtype=jnp.bfloat16))
    assert jnp.allclose(y_bf.astype(jnp.float32), y_ref, atol=1e-1, rtol=1e-1), \
        "bf16 mismatch vs reference"

    # 3) multi-tile grid + row-padding path (M not divisible by pack or tile).
    x3 = jax.random.normal(kx2, (3, 67, n_chans), dtype=jnp.float32)
    y3 = jax.block_until_ready(residual_block_forward(x3, w1, w2, tile_m=16))
    y3_ref = _reference(x3, w1, w2)
    assert jnp.allclose(y3, y3_ref, atol=1e-5, rtol=1e-5), "multi-tile mismatch"

    print("KERNEL_OK")
</pallas_src>

<mosaic_0001>
module attributes {stable_mosaic.version = 11 : i64} {
  func.func @_resblock_kernel(%arg0: i32, %arg1: memref<16x128xf32, #tpu.memory_space<vmem>>, %arg2: memref<128x128xf32, #tpu.memory_space<vmem>>, %arg3: memref<128x128xf32, #tpu.memory_space<vmem>>, %arg4: memref<16x128xf32, #tpu.memory_space<vmem>>) attributes {dimension_semantics = [#tpu.dimension_semantics<parallel>], iteration_bounds = array<i64: 1>, scalar_prefetch = 0 : i64, scratch_operands = 0 : i64, tpu.core_type = #tpu.core_type<tc>, window_params = [{transform_indices = @transform_0, window_bounds = array<i64: 16, 128>}, {pipeline_mode = #tpu.pipeline_mode<synchronous>, transform_indices = @transform_1, window_bounds = array<i64: 128, 128>}, {pipeline_mode = #tpu.pipeline_mode<synchronous>, transform_indices = @transform_2, window_bounds = array<i64: 128, 128>}, {transform_indices = @transform_3, window_bounds = array<i64: 16, 128>}]} {
    %c0 = arith.constant 0 : index
    %c0_0 = arith.constant 0 : index
    %0 = vector.load %arg1[%c0, %c0_0] : memref<16x128xf32, #tpu.memory_space<vmem>>, vector<16x128xf32>
    %c0_1 = arith.constant 0 : index
    %c0_2 = arith.constant 0 : index
    %1 = vector.load %arg2[%c0_1, %c0_2] : memref<128x128xf32, #tpu.memory_space<vmem>>, vector<128x128xf32>
    %cst = arith.constant dense<0.000000e+00> : vector<16x128xf32>
    %2 = tpu.matmul %0, %1, %cst {dimension_numbers = #tpu.dot_dimension_numbers<[1], [0], [0], [1], [0, 0, 1, 1], [], []>} : vector<16x128xf32>, vector<128x128xf32>, vector<16x128xf32> -> vector<16x128xf32>
    %cst_3 = arith.constant 0.000000e+00 : f32
    %3 = vector.broadcast %cst_3 : f32 to vector<16x128xf32>
    %4 = arith.maximumf %2, %3 : vector<16x128xf32>
    %c0_4 = arith.constant 0 : index
    %c0_5 = arith.constant 0 : index
    %5 = vector.load %arg3[%c0_4, %c0_5] : memref<128x128xf32, #tpu.memory_space<vmem>>, vector<128x128xf32>
    %cst_6 = arith.constant dense<0.000000e+00> : vector<16x128xf32>
    %6 = tpu.matmul %4, %5, %cst_6 {dimension_numbers = #tpu.dot_dimension_numbers<[1], [0], [0], [1], [0, 0, 1, 1], [], []>} : vector<16x128xf32>, vector<128x128xf32>, vector<16x128xf32> -> vector<16x128xf32>
    %cst_7 = arith.constant 0.000000e+00 : f32
    %7 = vector.broadcast %cst_7 : f32 to vector<16x128xf32>
    %8 = arith.maximumf %6, %7 : vector<16x128xf32>
    %9 = arith.addf %0, %8 : vector<16x128xf32>
    %c0_8 = arith.constant 0 : index
    %c0_9 = arith.constant 0 : index
    %10 = vector.load %arg4[%c0_8, %c0_9] : memref<16x128xf32, #tpu.memory_space<vmem>>, vector<16x128xf32>
    tpu.vector_store %arg4[%c0_8, %c0_9], %9 {strides = array<i32>} : memref<16x128xf32, #tpu.memory_space<vmem>>, vector<16x128xf32>,
    return
  }
  func.func @transform_0(%arg0: i32) -> (i32, i32) {
    %c0_i32 = arith.constant 0 : i32
    %c0_i32_0 = arith.constant 0 : i32
    return %arg0, %c0_i32 : i32, i32
  }
  func.func @transform_1(%arg0: i32) -> (i32, i32) {
    %c0_i32 = arith.constant 0 : i32
    %c0_i32_0 = arith.constant 0 : i32
    %c0_i32_1 = arith.constant 0 : i32
    return %c0_i32, %c0_i32_0 : i32, i32
  }
  func.func @transform_2(%arg0: i32) -> (i32, i32) {
    %c0_i32 = arith.constant 0 : i32
    %c0_i32_0 = arith.constant 0 : i32
    %c0_i32_1 = arith.constant 0 : i32
    return %c0_i32, %c0_i32_0 : i32, i32
  }
  func.func @transform_3(%arg0: i32) -> (i32, i32) {
    %c0_i32 = arith.constant 0 : i32
    %c0_i32_0 = arith.constant 0 : i32
    return %arg0, %c0_i32 : i32, i32
  }
}

</mosaic_0001>

<llo_original>
// kernel: tpu_custom_call.1
$region0: #{tpu_custom_call.1}
  #allocation0 [shape = 'u32[]', space=smem, size = 0x4, offset = 0x4, fixed_abs, tag = 'smem constant byte address 0x4 - core index']
  #allocation1 [shape = 'u32[72,128]{1,0:T(1,128)}', space=vmem, size = 0x9000, scoped, tag = 'internal scratch']
  %s0 = inlined_call_operand.hbm [shape: f32[16,128], index: 0, kind: input, shape index: {}]
  %s1 = inlined_call_operand.hbm [shape: f32[128,128], index: 1, kind: input, shape index: {}]
  %s2 = inlined_call_operand.hbm [shape: f32[128,128], index: 2, kind: input, shape index: {}]
  %s3 = inlined_call_operand.hbm [shape: f32[16,128], index: 3, kind: output, shape index: {}]
  %s4 = sld [smem:[#allocation0]]
  $region34: #{tpu_custom_call.1} parent=0
    _
  %s6 = ssub.s32 1, %s4
  %s7 = scalar_select 0, %s6, %s4
  $region1: #{tpu_custom_call.1} parent=0
    #allocation2 [shape = 'u8[8192]{0}', space=vmem, size = 0x2000, scoped, tag = 'input window, operand 0, single buffered']
    #allocation3 [shape = 's32[1]{0}', space=sflag, size = 0x4, scoped, tag = 'scoped memory for tpu_custom_call.1']
    #allocation4 [shape = 's32[1]{0}', space=sflag, size = 0x4, scoped, tag = 'scoped memory for tpu_custom_call.1']
    #allocation5 [shape = 'u8[65536]{0}', space=vmem, size = 0x10000, scoped, tag = 'input window, operand 1, single buffered']
    #allocation6 [shape = 's32[1]{0}', space=sflag, size = 0x4, scoped, tag = 'scoped memory for tpu_custom_call.1']
    #allocation7 [shape = 'u8[65536]{0}', space=vmem, size = 0x10000, scoped, tag = 'input window, operand 2, single buffered']
    #allocation8 [shape = 'u8[8192]{0}', space=vmem, size = 0x2000, scoped, tag = 'output window, operand 0, single buffered']
    %8 = vsyncpa [#allocation3], 0
    %9 = vsyncpa [#allocation6], 0
    %10 = vsyncpa [#allocation4], 0
    // Predicated region
    $region2: #{tpu_custom_call.1} parent=1 // pred_check
      _
    $region3: #{tpu_custom_call.1} parent=1 // pred_check_branch
      %12 = sbr.rel (0) target = $region5
    $region4: #{tpu_custom_call.1} parent=1 // pred_region
      %14 = vsyncadd [#allocation3], 0
      %s15 = sshll.u32 %s0, 4
      %s16 = int_to_ptr.hbm [resolvable:$true] %s15
      %s17 = sshll.u32 [#allocation2], 4
      %s18 = int_to_ptr.vmem [resolvable:$true] %s17
      %23 = dma.hbm_to_vmem [thread:$0]  %s16, 256, %s18, [#allocation3], 128, 128, 8
    $region5: #{tpu_custom_call.1} parent=1 // pred_fallthru
      _
    // Predicated region
    $region6: #{tpu_custom_call.1} parent=1 // pred_check
      _
    $region7: #{tpu_custom_call.1} parent=1 // pred_check_branch
      %25 = sbr.rel (0) target = $region9
    $region8: #{tpu_custom_call.1} parent=1 // pred_region
      %27 = vsyncadd [#allocation6], 0
      %s28 = sshll.u32 %s1, 4
      %s29 = int_to_ptr.hbm [resolvable:$true] %s28
      %s30 = sshll.u32 [#allocation5], 4
      %s31 = int_to_ptr.vmem [resolvable:$true] %s30
      %36 = dma.hbm_to_vmem [thread:$0]  %s29, 2048, %s31, [#allocation6], 128, 128, 8
    $region9: #{tpu_custom_call.1} parent=1 // pred_fallthru
      _
    // Predicated region
    $region10: #{tpu_custom_call.1} parent=1 // pred_check
      _
    $region11: #{tpu_custom_call.1} parent=1 // pred_check_branch
      %38 = sbr.rel (0) target = $region13
    $region12: #{tpu_custom_call.1} parent=1 // pred_region
      %40 = vsyncadd [#allocation6], 0
      %s41 = sshll.u32 %s2, 4
      %s42 = int_to_ptr.hbm [resolvable:$true] %s41
      %s43 = sshll.u32 [#allocation7], 4
      %s44 = int_to_ptr.vmem [resolvable:$true] %s43
      %49 = dma.hbm_to_vmem [thread:$0]  %s42, 2048, %s44, [#allocation6], 128, 128, 8
    $region13: #{tpu_custom_call.1} parent=1 // pred_fallthru
      _
    // Predicated region
    $region14: #{tpu_custom_call.1} parent=1 // pred_check
      _
    $region15: #{tpu_custom_call.1} parent=1 // pred_check_branch
      %51 = sbr.rel (0) target = $region17
    $region16: #{tpu_custom_call.1} parent=1 // pred_region
      %53 = dma.done [#allocation3], 256
    $region17: #{tpu_custom_call.1} parent=1 // pred_fallthru
      _
    // Predicated region
    $region18: #{tpu_custom_call.1} parent=1 // pred_check
      _
    $region19: #{tpu_custom_call.1} parent=1 // pred_check_branch
      %55 = sbr.rel (0) target = $region21
    $region20: #{tpu_custom_call.1} parent=1 // pred_region
      %57 = dma.done [#allocation6], 2048
    $region21: #{tpu_custom_call.1} parent=1 // pred_fallthru
      _
    // Predicated region
    $region22: #{tpu_custom_call.1} parent=1 // pred_check
      _
    $region23: #{tpu_custom_call.1} parent=1 // pred_check_branch
      %59 = sbr.rel (0) target = $region25
    $region24: #{tpu_custom_call.1} parent=1 // pred_region
      %61 = dma.done [#allocation6], 2048
    $region25: #{tpu_custom_call.1} parent=1 // pred_fallthru
      _
    %v62 = vld [vmem:[#allocation2] sm:$0xff]
    %v63 = vld [vmem:[#allocation2 + $0x8] sm:$0xff]
    %v64 = vld [vmem:[#allocation5] sm:$0xff]
    %v65 = vld [vmem:[#allocation5 + $0x8] sm:$0xff]
    %v66 = vld [vmem:[#allocation5 + $0x10] sm:$0xff]
    %v67 = vld [vmem:[#allocation5 + $0x18] sm:$0xff]
    %v68 = vld [vmem:[#allocation5 + $0x20] sm:$0xff]
    %v69 = vld [vmem:[#allocation5 + $0x28] sm:$0xff]
    %v70 = vld [vmem:[#allocation5 + $0x30] sm:$0xff]
    %v71 = vld [vmem:[#allocation5 + $0x38] sm:$0xff]
    %v72 = vld [vmem:[#allocation5 + $0x40] sm:$0xff]
    %v73 = vld [vmem:[#allocation5 + $0x48] sm:$0xff]
    %v74 = vld [vmem:[#allocation5 + $0x50] sm:$0xff]
    %v75 = vld [vmem:[#allocation5 + $0x58] sm:$0xff]
    %v76 = vld [vmem:[#allocation5 + $0x60] sm:$0xff]
    %v77 = vld [vmem:[#allocation5 + $0x68] sm:$0xff]
    %v78 = vld [vmem:[#allocation5 + $0x70] sm:$0xff]
    %v79 = vld [vmem:[#allocation5 + $0x78] sm:$0xff]
    %80 = vmatpush.msra.mxu0 %v79
    %81 = vmatpush.msra.mxu0 %v78
    %82 = vmatpush.msra.mxu0 %v77
    %83 = vmatpush.msra.mxu0 %v76
    %84 = vmatpush.msra.mxu0 %v75
    %85 = vmatpush.msra.mxu0 %v74
    %86 = vmatpush.msra.mxu0 %v73
    %87 = vmatpush.msra.mxu0 %v72
    %88 = vmatpush.msra.mxu0 %v71
    %89 = vmatpush.msra.mxu0 %v70
    %90 = vmatpush.msra.mxu0 %v69
    %91 = vmatpush.msra.mxu0 %v68
    %92 = vmatpush.msra.mxu0 %v67
    %93 = vmatpush.msra.mxu0 %v66
    %94 = vmatpush.msra.mxu0 %v65
    %95 = vmatpush.msra.mxu0 %v64
    %96 = vmatmul.f32.gmra.mxu0 %v62
    %v97 = vpop.f32.mrf.mxu0
    %v98 = vadd.f32 0.0, %v97
    %99 = vmatmul.f32.gmra.mxu0 %v63
    %v100 = vpop.f32.mrf.mxu0
    %v101 = vadd.f32 0.0, %v100
    %102 = vdwg.mxu0
    %v103 = vmax.f32 %v98, 0.0
    %v104 = vmax.f32 %v101, 0.0
    %v105 = vld [vmem:[#allocation7] sm:$0xff]
    %v106 = vld [vmem:[#allocation7 + $0x8] sm:$0xff]
    %v107 = vld [vmem:[#allocation7 + $0x10] sm:$0xff]
    %v108 = vld [vmem:[#allocation7 + $0x18] sm:$0xff]
    %v109 = vld [vmem:[#allocation7 + $0x20] sm:$0xff]
    %v110 = vld [vmem:[#allocation7 + $0x28] sm:$0xff]
    %v111 = vld [vmem:[#allocation7 + $0x30] sm:$0xff]
    %v112 = vld [vmem:[#allocation7 + $0x38] sm:$0xff]
    %v113 = vld [vmem:[#allocation7 + $0x40] sm:$0xff]
    %v114 = vld [vmem:[#allocation7 + $0x48] sm:$0xff]
    %v115 = vld [vmem:[#allocation7 + $0x50] sm:$0xff]
    %v116 = vld [vmem:[#allocation7 + $0x58] sm:$0xff]
    %v117 = vld [vmem:[#allocation7 + $0x60] sm:$0xff]
    %v118 = vld [vmem:[#allocation7 + $0x68] sm:$0xff]
    %v119 = vld [vmem:[#allocation7 + $0x70] sm:$0xff]
    %v120 = vld [vmem:[#allocation7 + $0x78] sm:$0xff]
    %121 = vmatpush.msra.mxu0 %v120
    %122 = vmatpush.msra.mxu0 %v119
    %123 = vmatpush.msra.mxu0 %v118
    %124 = vmatpush.msra.mxu0 %v117
    %125 = vmatpush.msra.mxu0 %v116
    %126 = vmatpush.msra.mxu0 %v115
    %127 = vmatpush.msra.mxu0 %v114
    %128 = vmatpush.msra.mxu0 %v113
    %129 = vmatpush.msra.mxu0 %v112
    %130 = vmatpush.msra.mxu0 %v111
    %131 = vmatpush.msra.mxu0 %v110
    %132 = vmatpush.msra.mxu0 %v109
    %133 = vmatpush.msra.mxu0 %v108
    %134 = vmatpush.msra.mxu0 %v107
    %135 = vmatpush.msra.mxu0 %v106
    %136 = vmatpush.msra.mxu0 %v105
    %137 = vmatmul.f32.gmra.mxu0 %v103
    %v138 = vpop.f32.mrf.mxu0
    %v139 = vadd.f32 0.0, %v138
    %140 = vmatmul.f32.gmra.mxu0 %v104
    %v141 = vpop.f32.mrf.mxu0
    %v142 = vadd.f32 0.0, %v141
    %143 = vdwg.mxu0
    %v144 = vmax.f32 %v139, 0.0
    %v145 = vmax.f32 %v142, 0.0
    %v146 = vadd.f32 %v62, %v144
    %v147 = vadd.f32 %v63, %v145
    %148 = vst [vmem:[#allocation8] sm:$0xff] %v146
    %149 = vst [vmem:[#allocation8 + $0x8] sm:$0xff] %v147
    // Predicated region
    $region26: #{tpu_custom_call.1} parent=1 // pred_check
      _
    $region27: #{tpu_custom_call.1} parent=1 // pred_check_branch
      %151 = sbr.rel (0) target = $region29
    $region28: #{tpu_custom_call.1} parent=1 // pred_region
      %153 = vsyncadd [#allocation4], 0
      %s154 = sshll.u32 [#allocation8], 4
      %s155 = int_to_ptr.vmem [resolvable:$true] %s154
      %s156 = sshll.u32 %s3, 4
      %s157 = int_to_ptr.hbm [resolvable:$true] %s156
      %162 = dma.vmem_to_hbm [thread:$0]  %s155, 256, %s157, [#allocation4], 128, 128, 8
    $region29: #{tpu_custom_call.1} parent=1 // pred_fallthru
      _
    // Predicated region
    $region30: #{tpu_custom_call.1} parent=1 // pred_check
      _
    $region31: #{tpu_custom_call.1} parent=1 // pred_check_branch
      %164 = sbr.rel (0) target = $region33
    $region32: #{tpu_custom_call.1} parent=1 // pred_region
      %166 = dma.done [#allocation4], 256
    $region33: #{tpu_custom_call.1} parent=1 // pred_fallthru
      _
    %167 = vsyncpa [#allocation3], 1
    %168 = vsyncpa [#allocation6], 1
    %169 = vsyncpa [#allocation4], 1

</llo_original>
